<compile_context>
chip_gen: v5e
topology: v5e:2x2
jax: 0.10.0
libtpu: 0.0.40
codegen_flags: <defaults>
</compile_context>

<pallas_src>
import functools

import jax
import jax.numpy as jnp
from jax.experimental import pallas as pl
from jax.experimental.pallas import tpu as pltpu


def _round_up(x, m):
    return (x + m - 1) // m * m


# ----------------------------- Pallas kernel ------------------------------ #
def _fused_hgnnp_kernel(hdv_ref, hdet_ref, x0_ref, w_ref, b_ref, o_ref):
    """One grid step == one HGNNPConv layer.

    The output block (constant index map) stays resident in VMEM across the whole
    layer grid, so it is used directly as the activation accumulator.
    """
    l = pl.program_id(0)

    @pl.when(l == 0)
    def _init():
        o_ref[...] = x0_ref[...]

    cd = hdv_ref.dtype                     # MXU compute dtype: bfloat16
    x = o_ref[...]                         # (Np, Cp) f32 activation (VMEM resident)
    w = w_ref[0]                           # (Cp, Cp) this layer's weight (bf16)
    b = b_ref[0]                           # (1, Cp)  this layer's bias   (f32)

    # theta: X @ W + b      (bf16 MXU inputs, f32 accumulation)
    xw = jnp.dot(x.astype(cd), w, preferred_element_type=jnp.float32) + b

    # hg.v2v(xw, aggr="mean") = (D_v^{-1} H) @ ((D_e^{-1} H^T) @ xw)
    # (degree scalings pre-folded into the incidence factors outside the kernel)
    m = jnp.dot(hdet_ref[...], xw.astype(cd),
                preferred_element_type=jnp.float32)          # (Ep, Cp)
    y = jnp.dot(hdv_ref[...], m.astype(cd),
                preferred_element_type=jnp.float32)          # (Np, Cp)

    # ReLU (HGNNPConv is_last=False); eval-mode dropout = identity.
    o_ref[...] = jnp.maximum(y, 0.0)


# ------------------------------ glue (JAX) -------------------------------- #
def build_hypergraph_factors(num_vertices, hyperedge_index, num_edges):
    """Incidence H plus inverse edge/vertex degrees (dhg Hypergraph, mean aggr)."""
    row, col = hyperedge_index[0], hyperedge_index[1]
    H = jnp.zeros((num_vertices, num_edges), jnp.float32).at[row, col].set(1.0)
    d_e = H.sum(axis=0)                    # edge degrees
    d_v = H.sum(axis=1)                    # vertex degrees
    de_inv = jnp.where(d_e > 0, 1.0 / d_e, 0.0)
    dv_inv = jnp.where(d_v > 0, 1.0 / d_v, 0.0)
    return H, de_inv, dv_inv


@functools.partial(jax.jit, static_argnames=("num_edges",))
def dhg_hgnnp_forward(x, hyperedge_index, params, *, num_edges):
    N, c_in = x.shape
    c_hidden = params[0][0].shape[1]
    num_layers = len(params)

    n_pad = _round_up(N, 8)                          # sublane multiple
    c_pad = _round_up(max(c_in, c_hidden), 128)      # lane-dense feature dim
    e_pad = _round_up(num_edges, 128)                # lane-dense edge dim

    H, de_inv, dv_inv = build_hypergraph_factors(N, hyperedge_index, num_edges)

    # Fold degree scalings into the static incidence factors once (outside kernel).
    h_dv = dv_inv[:, None] * H                       # (N, E)  = D_v^{-1} H
    h_de_t = de_inv[:, None] * H.T                   # (E, N)  = D_e^{-1} H^T

    # Zero padding is inert: padded edges/vertices have zero rows, padded feature
    # columns stay zero.
    hdv_p = jnp.zeros((n_pad, e_pad), jnp.float32).at[:N, :num_edges].set(h_dv)
    hdet_p = jnp.zeros((e_pad, n_pad), jnp.float32).at[:num_edges, :N].set(h_de_t)
    x0 = jnp.zeros((n_pad, c_pad), jnp.float32).at[:N, :c_in].set(x)

    w_stack = jnp.zeros((num_layers, c_pad, c_pad), jnp.float32)
    b_stack = jnp.zeros((num_layers, 1, c_pad), jnp.float32)
    for i, (W, b) in enumerate(params):
        ci, co = W.shape
        w_stack = w_stack.at[i, :ci, :co].set(W)
        b_stack = b_stack.at[i, 0, :co].set(b)

    # bf16 MXU inputs; accumulation stays f32 in-kernel.
    compute_dtype = jnp.bfloat16
    hdv_c = hdv_p.astype(compute_dtype)
    hdet_c = hdet_p.astype(compute_dtype)
    w_c = w_stack.astype(compute_dtype)

    # VMEM budget: conservatively 2x (double-buffered) per-step blocks + slack.
    block_bytes = (hdv_c.size * 2 + hdet_c.size * 2 + x0.size * 4
                   + c_pad * c_pad * 2 + c_pad * 4 + n_pad * c_pad * 4)
    vmem_limit = int(min(2 * block_bytes + (8 << 20), 64 << 20))

    flops = 2 * num_layers * (n_pad * c_pad * c_pad + 2 * n_pad * e_pad * c_pad)
    bytes_accessed = int(hdv_c.size * 2 + hdet_c.size * 2 + x0.size * 4
                         + w_c.size * 2 + b_stack.size * 4 + n_pad * c_pad * 4)

    out = pl.pallas_call(
        _fused_hgnnp_kernel,
        out_shape=jax.ShapeDtypeStruct((n_pad, c_pad), jnp.float32),
        grid_spec=pltpu.PrefetchScalarGridSpec(
            num_scalar_prefetch=0,
            grid=(num_layers,),
            in_specs=[
                pl.BlockSpec((n_pad, e_pad), lambda l: (0, 0)),          # Dv^-1 H
                pl.BlockSpec((e_pad, n_pad), lambda l: (0, 0)),          # De^-1 H^T
                pl.BlockSpec((n_pad, c_pad), lambda l: (0, 0)),          # X0
                pl.BlockSpec((1, c_pad, c_pad), lambda l: (l, 0, 0)),    # W_l
                pl.BlockSpec((1, 1, c_pad), lambda l: (l, 0, 0)),        # b_l
            ],
            out_specs=pl.BlockSpec((n_pad, c_pad), lambda l: (0, 0)),
        ),
        compiler_params=pltpu.CompilerParams(
            dimension_semantics=("arbitrary",),      # layers are sequential
            vmem_limit_bytes=vmem_limit,
        ),
        cost_estimate=pl.CostEstimate(flops=int(flops), transcendentals=0,
                                      bytes_accessed=bytes_accessed),
    )(hdv_c, hdet_c, x0, w_c, b_stack)

    return out[:N, :c_hidden]


def init_params(key, in_channels, hidden_channels, num_layers):
    """Deterministic synthetic weights for the stack of HGNNPConv linear layers."""
    params = []
    c_in = in_channels
    for _ in range(num_layers):
        key, kw, kb = jax.random.split(key, 3)
        W = 0.1 * jax.random.normal(kw, (c_in, hidden_channels), jnp.float32)
        b = 0.01 * jax.random.normal(kb, (hidden_channels,), jnp.float32)
        params.append((W, b))
        c_in = hidden_channels
    return params


def dhg_hgnnp_reference(x, hyperedge_index, params, num_edges):
    """Pure-JAX f32 reference with the dense P = D_v^{-1} H D_e^{-1} H^T operator."""
    H, de_inv, dv_inv = build_hypergraph_factors(x.shape[0], hyperedge_index, num_edges)
    P = dv_inv[:, None] * (H @ (de_inv[:, None] * H.T))
    for W, b in params:
        x = jnp.maximum(P @ (x @ W + b[None, :]), 0.0)
    return x


# --------------------------------- main ----------------------------------- #
if __name__ == "__main__":
    key = jax.random.PRNGKey(0)

    N = 8                      # num vertices
    in_channels = 16
    hidden_channels = 32
    num_layers = 2
    num_edges = 4              # static (matches hyperedge_index below)

    key, kx = jax.random.split(key)
    x = jax.random.normal(kx, (N, in_channels), jnp.float32)

    # hyperedge_index: row 0 = vertex ids, row 1 = hyperedge ids (4 hyperedges)
    hyperedge_index = jnp.array(
        [[0, 1, 2, 2, 3, 4, 4, 5, 6, 7, 0, 7],
         [0, 0, 0, 1, 1, 1, 2, 2, 2, 2, 3, 3]], dtype=jnp.int32)

    params = init_params(key, in_channels, hidden_channels, num_layers)

    out = dhg_hgnnp_forward(x, hyperedge_index, params, num_edges=num_edges)
    out = jax.block_until_ready(out)

    ref = dhg_hgnnp_reference(x, hyperedge_index, params, num_edges)
    assert out.shape == (N, hidden_channels)
    # bf16 MXU inputs with f32 accumulation -> loosened tolerance vs. f32 reference.
    assert jnp.allclose(out, ref, atol=2e-2, rtol=2e-2), "mismatch vs pure-JAX reference"

    print("KERNEL_OK")
</pallas_src>

<mosaic_0001>
module attributes {stable_mosaic.version = 11 : i64} {
  func.func @_fused_hgnnp_kernel(%arg0: i32, %arg1: memref<8x128xbf16, #tpu.memory_space<vmem>>, %arg2: memref<128x8xbf16, #tpu.memory_space<vmem>>, %arg3: memref<8x128xf32, #tpu.memory_space<vmem>>, %arg4: memref<1x128x128xbf16, #tpu.memory_space<vmem>>, %arg5: memref<1x1x128xf32, #tpu.memory_space<vmem>>, %arg6: memref<8x128xf32, #tpu.memory_space<vmem>>) attributes {dimension_semantics = [#tpu.dimension_semantics<arbitrary>], iteration_bounds = array<i64: 2>, scalar_prefetch = 0 : i64, scratch_operands = 0 : i64, tpu.core_type = #tpu.core_type<tc>, window_params = [{pipeline_mode = #tpu.pipeline_mode<synchronous>, transform_indices = @transform_0, window_bounds = array<i64: 8, 128>}, {pipeline_mode = #tpu.pipeline_mode<synchronous>, transform_indices = @transform_1, window_bounds = array<i64: 128, 8>}, {pipeline_mode = #tpu.pipeline_mode<synchronous>, transform_indices = @transform_2, window_bounds = array<i64: 8, 128>}, {transform_indices = @transform_3, window_bounds = array<i64: 1, 128, 128>}, {transform_indices = @transform_4, window_bounds = array<i64: 1, 1, 128>}, {pipeline_mode = #tpu.pipeline_mode<synchronous>, transform_indices = @transform_5, window_bounds = array<i64: 8, 128>}]} {
    %c0_i32 = arith.constant 0 : i32
    %0 = arith.cmpi eq, %arg0, %c0_i32 : i32
    %1 = arith.extui %0 : i1 to i32
    %c0_i32_0 = arith.constant 0 : i32
    %2 = arith.cmpi ne, %1, %c0_i32_0 : i32
    scf.if %2 {
      %c0_17 = arith.constant 0 : index
      %c0_18 = arith.constant 0 : index
      %21 = vector.load %arg3[%c0_17, %c0_18] : memref<8x128xf32, #tpu.memory_space<vmem>>, vector<8x128xf32>
      %c0_19 = arith.constant 0 : index
      %c0_20 = arith.constant 0 : index
      %22 = vector.load %arg6[%c0_19, %c0_20] : memref<8x128xf32, #tpu.memory_space<vmem>>, vector<8x128xf32>
      tpu.vector_store %arg6[%c0_19, %c0_20], %21 {strides = array<i32>} : memref<8x128xf32, #tpu.memory_space<vmem>>, vector<8x128xf32>,
    } else {
    }
    %c0 = arith.constant 0 : index
    %c0_1 = arith.constant 0 : index
    %3 = vector.load %arg6[%c0, %c0_1] : memref<8x128xf32, #tpu.memory_space<vmem>>, vector<8x128xf32>
    %c0_2 = arith.constant 0 : index
    %c0_3 = arith.constant 0 : index
    %c0_4 = arith.constant 0 : index
    %4 = vector.load %arg4[%c0_2, %c0_3, %c0_4] : memref<1x128x128xbf16, #tpu.memory_space<vmem>>, vector<1x128x128xbf16>
    %5 = vector.shape_cast %4 : vector<1x128x128xbf16> to vector<128x128xbf16>
    %c0_5 = arith.constant 0 : index
    %c0_6 = arith.constant 0 : index
    %c0_7 = arith.constant 0 : index
    %6 = vector.load %arg5[%c0_5, %c0_6, %c0_7] : memref<1x1x128xf32, #tpu.memory_space<vmem>>, vector<1x1x128xf32>
    %7 = vector.shape_cast %6 : vector<1x1x128xf32> to vector<1x128xf32>
    %8 = arith.truncf %3 : vector<8x128xf32> to vector<8x128xbf16>
    %cst = arith.constant dense<0.000000e+00> : vector<8x128xf32>
    %9 = tpu.matmul %8, %5, %cst {dimension_numbers = #tpu.dot_dimension_numbers<[1], [0], [0], [1], [0, 0, 1, 1], [], []>} : vector<8x128xbf16>, vector<128x128xbf16>, vector<8x128xf32> -> vector<8x128xf32>
    %10 = vector.broadcast %7 : vector<1x128xf32> to vector<8x128xf32>
    %11 = arith.addf %9, %10 : vector<8x128xf32>
    %c0_8 = arith.constant 0 : index
    %c0_9 = arith.constant 0 : index
    %12 = vector.load %arg2[%c0_8, %c0_9] : memref<128x8xbf16, #tpu.memory_space<vmem>>, vector<128x8xbf16>
    %13 = arith.truncf %11 : vector<8x128xf32> to vector<8x128xbf16>
    %cst_10 = arith.constant dense<0.000000e+00> : vector<128x128xf32>
    %14 = tpu.matmul %12, %13, %cst_10 {dimension_numbers = #tpu.dot_dimension_numbers<[1], [0], [0], [1], [0, 0, 1, 1], [], []>} : vector<128x8xbf16>, vector<8x128xbf16>, vector<128x128xf32> -> vector<128x128xf32>
    %c0_11 = arith.constant 0 : index
    %c0_12 = arith.constant 0 : index
    %15 = vector.load %arg1[%c0_11, %c0_12] : memref<8x128xbf16, #tpu.memory_space<vmem>>, vector<8x128xbf16>
    %16 = arith.truncf %14 : vector<128x128xf32> to vector<128x128xbf16>
    %cst_13 = arith.constant dense<0.000000e+00> : vector<8x128xf32>
    %17 = tpu.matmul %15, %16, %cst_13 {dimension_numbers = #tpu.dot_dimension_numbers<[1], [0], [0], [1], [0, 0, 1, 1], [], []>} : vector<8x128xbf16>, vector<128x128xbf16>, vector<8x128xf32> -> vector<8x128xf32>
    %cst_14 = arith.constant 0.000000e+00 : f32
    %18 = vector.broadcast %cst_14 : f32 to vector<8x128xf32>
    %19 = arith.maximumf %17, %18 : vector<8x128xf32>
    %c0_15 = arith.constant 0 : index
    %c0_16 = arith.constant 0 : index
    %20 = vector.load %arg6[%c0_15, %c0_16] : memref<8x128xf32, #tpu.memory_space<vmem>>, vector<8x128xf32>
    tpu.vector_store %arg6[%c0_15, %c0_16], %19 {strides = array<i32>} : memref<8x128xf32, #tpu.memory_space<vmem>>, vector<8x128xf32>,
    return
  }
  func.func @transform_0(%arg0: i32) -> (i32, i32) {
    %c0_i32 = arith.constant 0 : i32
    %c0_i32_0 = arith.constant 0 : i32
    %c0_i32_1 = arith.constant 0 : i32
    return %c0_i32, %c0_i32_0 : i32, i32
  }
  func.func @transform_1(%arg0: i32) -> (i32, i32) {
    %c0_i32 = arith.constant 0 : i32
    %c0_i32_0 = arith.constant 0 : i32
    %c0_i32_1 = arith.constant 0 : i32
    return %c0_i32, %c0_i32_0 : i32, i32
  }
  func.func @transform_2(%arg0: i32) -> (i32, i32) {
    %c0_i32 = arith.constant 0 : i32
    %c0_i32_0 = arith.constant 0 : i32
    %c0_i32_1 = arith.constant 0 : i32
    return %c0_i32, %c0_i32_0 : i32, i32
  }
  func.func @transform_3(%arg0: i32) -> (i32, i32, i32) {
    %c0_i32 = arith.constant 0 : i32
    %c0_i32_0 = arith.constant 0 : i32
    %c0_i32_1 = arith.constant 0 : i32
    return %arg0, %c0_i32, %c0_i32_0 : i32, i32, i32
  }
  func.func @transform_4(%arg0: i32) -> (i32, i32, i32) {
    %c0_i32 = arith.constant 0 : i32
    %c0_i32_0 = arith.constant 0 : i32
    %c0_i32_1 = arith.constant 0 : i32
    return %arg0, %c0_i32, %c0_i32_0 : i32, i32, i32
  }
  func.func @transform_5(%arg0: i32) -> (i32, i32) {
    %c0_i32 = arith.constant 0 : i32
    %c0_i32_0 = arith.constant 0 : i32
    %c0_i32_1 = arith.constant 0 : i32
    return %c0_i32, %c0_i32_0 : i32, i32
  }
}

</mosaic_0001>

<llo_original>
// kernel: dhg_hgnnp_forward.1
$region0: #{dhg_hgnnp_forward.1}
  #allocation0 [shape = 'u32[]', space=smem, size = 0x4, offset = 0x4, fixed_abs, tag = 'smem constant byte address 0x4 - core index']
  #allocation1 [shape = 'u32[72,128]{1,0:T(1,128)}', space=vmem, size = 0x9000, scoped, tag = 'internal scratch']
  %s0 = inlined_call_operand.vmem [shape: bf16[8,128], index: 0, kind: input, shape index: {}]
  %s1 = inlined_call_operand.vmem [shape: bf16[128,8], index: 1, kind: input, shape index: {}]
  %s2 = inlined_call_operand.vmem [shape: f32[8,128], index: 2, kind: input, shape index: {}]
  %s3 = inlined_call_operand.vmem [shape: bf16[2,128,128], index: 3, kind: input, shape index: {}]
  %s4 = inlined_call_operand.vmem [shape: f32[2,1,128], index: 4, kind: input, shape index: {}]
  %s5 = inlined_call_operand.hbm [shape: f32[8,128], index: 5, kind: output, shape index: {}]
  %s6 = sld [smem:[#allocation0]]
  $region57: #{dhg_hgnnp_forward.1} parent=0
    _
  %s8 = ssub.s32 1, %s6
  %s9 = scalar_select 0, %s8, %s6
  $region1: #{dhg_hgnnp_forward.1} parent=0
    #allocation2 [shape = 'u8[4096]{0}', space=vmem, size = 0x1000, scoped, tag = 'output window, operand 0, single buffered']
    #allocation3 [shape = 's32[2]{0}', space=sflag, size = 0x8, scoped, tag = 'scoped memory for dhg_hgnnp_forward.1']
    %10 = vsyncpa [#allocation3], 0
    loop: start=0, step=1, limit=4
    $region2: #{dhg_hgnnp_forward.1} parent=1 // loop_pre_header
      _
    $region3: #{dhg_hgnnp_forward.1} parent=1 // loop_header
      %s12 = sphi 0, %s16
      %p13 = scmp.ge.s32.totalorder %s12, 4
      %s20 = sphi 0, %s20
      %s22 = sphi 0, %s20
      %s23 = sphi 0, %s22
      %s37 = sphi 0, %s23
      %s41 = sphi 0, %s41
      %s43 = sphi 0, %s41
      %s44 = sphi 0, %s43
      %s58 = sphi 0, %s44
      %s62 = sphi 0, %s62
      %s64 = sphi 0, %s62
      %s65 = sphi 0, %s64
      %s79 = sphi 0, %s65
      %s85 = sphi 0, %s87
      %s88 = sphi 0, %s85
      %s89 = sphi 0, %s88
      %s105 = sphi 0, %s89
      %s111 = sphi 0, %s113
      %s114 = sphi 0, %s111
      %s115 = sphi 0, %s114
      %s131 = sphi 0, %s115
      %s135 = sphi 0, %s135
      %s137 = sphi 0, %s135
      %s138 = sphi 0, %s137
      %s152 = sphi 0, %s138
    $region4: #{dhg_hgnnp_forward.1} parent=1 // loop_header_branch
      %15 = sbr.rel (%p13) target = $region8
    $region5: #{dhg_hgnnp_forward.1} parent=1 // loop_body
      %s17 = ssub.s32 %s12, 1
      %s18 = ssub.s32 %s12, 2
      %s19 = sadd.s32 %s12, 1
      %s21 = sadd.s32 %s20, 1
      %p24 = scmp.eq.s32.totalorder %s12, 1
      %p25 = scmp.ne.s32.totalorder %s20, %s22
      %p26 = scmp.eq.s32.totalorder %s12, 0
      %p27 = por %p25, %p26
      %p28 = scmp.ne.s32.totalorder %s20, %s22
      %p29 = scmp.eq.s32.totalorder %s17, 1
      %p30 = por %p28, %p29
      %p31 = scmp.ne.s32.totalorder %s22, %s23
      %p32 = scmp.eq.s32.totalorder %s17, 0
      %p33 = por %p31, %p32
      %p34 = scmp.ne.s32.totalorder %s22, %s23
      %p35 = scmp.eq.s32.totalorder %s18, 1
      %p36 = por %p34, %p35
      %p38 = scmp.ne.s32.totalorder %s23, %s37
      %p39 = scmp.eq.s32.totalorder %s18, 0
      %p40 = por %p38, %p39
      %s42 = sadd.s32 %s41, 1
      %p45 = scmp.eq.s32.totalorder %s12, 1
      %p46 = scmp.ne.s32.totalorder %s41, %s43
      %p47 = scmp.eq.s32.totalorder %s12, 0
      %p48 = por %p46, %p47
      %p49 = scmp.ne.s32.totalorder %s41, %s43
      %p50 = scmp.eq.s32.totalorder %s17, 1
      %p51 = por %p49, %p50
      %p52 = scmp.ne.s32.totalorder %s43, %s44
      %p53 = scmp.eq.s32.totalorder %s17, 0
      %p54 = por %p52, %p53
      %p55 = scmp.ne.s32.totalorder %s43, %s44
      %p56 = scmp.eq.s32.totalorder %s18, 1
      %p57 = por %p55, %p56
      %p59 = scmp.ne.s32.totalorder %s44, %s58
      %p60 = scmp.eq.s32.totalorder %s18, 0
      %p61 = por %p59, %p60
      %s63 = sadd.s32 %s62, 1
      %p66 = scmp.eq.s32.totalorder %s12, 1
      %p67 = scmp.ne.s32.totalorder %s62, %s64
      %p68 = scmp.eq.s32.totalorder %s12, 0
      %p69 = por %p67, %p68
      %p70 = scmp.ne.s32.totalorder %s62, %s64
      %p71 = scmp.eq.s32.totalorder %s17, 1
      %p72 = por %p70, %p71
      %p73 = scmp.ne.s32.totalorder %s64, %s65
      %p74 = scmp.eq.s32.totalorder %s17, 0
      %p75 = por %p73, %p74
      %p76 = scmp.ne.s32.totalorder %s64, %s65
      %p77 = scmp.eq.s32.totalorder %s18, 1
      %p78 = por %p76, %p77
      %p80 = scmp.ne.s32.totalorder %s65, %s79
      %p81 = scmp.eq.s32.totalorder %s18, 0
      %p82 = por %p80, %p81
      %s83 = ssub.s32 %s12, %s19
      %p84 = scmp.eq.s32.totalorder %s83, 0
      %s86 = sadd.s32 %s85, 1
      %s87 = scalar_select %p84, %s85, %s86
      %p90 = pneg %p84
      %p91 = scmp.eq.s32.totalorder %s12, 1
      %p92 = por %p90, %p91
      %p93 = scmp.ne.s32.totalorder %s85, %s88
      %p94 = scmp.eq.s32.totalorder %s12, 0
      %p95 = por %p93, %p94
      %p96 = scmp.ne.s32.totalorder %s85, %s88
      %p97 = scmp.eq.s32.totalorder %s17, 1
      %p98 = por %p96, %p97
      %p99 = scmp.ne.s32.totalorder %s88, %s89
      %p100 = scmp.eq.s32.totalorder %s17, 0
      %p101 = por %p99, %p100
      %p102 = scmp.ne.s32.totalorder %s88, %s89
      %p103 = scmp.eq.s32.totalorder %s18, 1
      %p104 = por %p102, %p103
      %p106 = scmp.ne.s32.totalorder %s89, %s105
      %p107 = scmp.eq.s32.totalorder %s18, 0
      %p108 = por %p106, %p107
      %s109 = ssub.s32 %s12, %s19
      %p110 = scmp.eq.s32.totalorder %s109, 0
      %s112 = sadd.s32 %s111, 1
      %s113 = scalar_select %p110, %s111, %s112
      %p116 = pneg %p110
      %p117 = scmp.eq.s32.totalorder %s12, 1
      %p118 = por %p116, %p117
      %p119 = scmp.ne.s32.totalorder %s111, %s114
      %p120 = scmp.eq.s32.totalorder %s12, 0
      %p121 = por %p119, %p120
      %p122 = scmp.ne.s32.totalorder %s111, %s114
      %p123 = scmp.eq.s32.totalorder %s17, 1
      %p124 = por %p122, %p123
      %p125 = scmp.ne.s32.totalorder %s114, %s115
      %p126 = scmp.eq.s32.totalorder %s17, 0
      %p127 = por %p125, %p126
      %p128 = scmp.ne.s32.totalorder %s114, %s115
      %p129 = scmp.eq.s32.totalorder %s18, 1
      %p130 = por %p128, %p129
      %p132 = scmp.ne.s32.totalorder %s115, %s131
      %p133 = scmp.eq.s32.totalorder %s18, 0
      %p134 = por %p132, %p133
      %s136 = sadd.s32 %s135, 1
      %p139 = scmp.eq.s32.totalorder %s12, 1
      %p140 = scmp.ne.s32.totalorder %s135, %s137
      %p141 = scmp.eq.s32.totalorder %s12, 0
      %p142 = por %p140, %p141
      %p143 = scmp.ne.s32.totalorder %s135, %s137
      %p144 = scmp.eq.s32.totalorder %s17, 1
      %p145 = por %p143, %p144
      %p146 = scmp.ne.s32.totalorder %s137, %s138
      %p147 = scmp.eq.s32.totalorder %s17, 0
      %p148 = por %p146, %p147
      %p149 = scmp.ne.s32.totalorder %s137, %s138
      %p150 = scmp.eq.s32.totalorder %s18, 1
      %p151 = por %p149, %p150
      %p153 = scmp.ne.s32.totalorder %s138, %s152
      %p154 = scmp.eq.s32.totalorder %s18, 0
      %p155 = por %p153, %p154
      %p156 = scmp.le.s32.totalorder 1, %s12
      %p157 = scmp.lt.s32.totalorder %s12, 3
      %p158 = pnand %p156, %p157
      %p159 = pneg %p158
      // Predicated region
      $region9: #{dhg_hgnnp_forward.1} parent=5 // pred_check
        _
      $region10: #{dhg_hgnnp_forward.1} parent=5 // pred_check_branch
        %161 = sbr.rel (%p158) target = $region12
      $region11: #{dhg_hgnnp_forward.1} parent=5 // pred_region
        %s162 = ssub.s32 %s12, 1
        // Predicated region
        $region13: #{dhg_hgnnp_forward.1} parent=11 // pred_check
          %p163 = pneg %p33
        $region14: #{dhg_hgnnp_forward.1} parent=11 // pred_check_branch
          %165 = sbr.rel (%p163) target = $region16
        $region15: #{dhg_hgnnp_forward.1} parent=11 // pred_region
          _
        $region16: #{dhg_hgnnp_forward.1} parent=11 // pred_fallthru
          _
        // Predicated region
        $region17: #{dhg_hgnnp_forward.1} parent=11 // pred_check
          %p166 = pneg %p54
        $region18: #{dhg_hgnnp_forward.1} parent=11 // pred_check_branch
          %168 = sbr.rel (%p166) target = $region20
        $region19: #{dhg_hgnnp_forward.1} parent=11 // pred_region
          _
        $region20: #{dhg_hgnnp_forward.1} parent=11 // pred_fallthru
          _
        // Predicated region
        $region21: #{dhg_hgnnp_forward.1} parent=11 // pred_check
          %p169 = pneg %p75
        $region22: #{dhg_hgnnp_forward.1} parent=11 // pred_check_branch
          %171 = sbr.rel (%p169) target = $region24
        $region23: #{dhg_hgnnp_forward.1} parent=11 // pred_region
          _
        $region24: #{dhg_hgnnp_forward.1} parent=11 // pred_fallthru
          _
      $region12: #{dhg_hgnnp_forward.1} parent=5 // pred_fallthru
        _
      %p172 = scmp.lt.s32.totalorder %s12, 2
      // Predicated region
      $region25: #{dhg_hgnnp_forward.1} parent=5 // pred_check
        %p173 = pneg %p172
      $region26: #{dhg_hgnnp_forward.1} parent=5 // pred_check_branch
        %175 = sbr.rel (%p173) target = $region28
      $region27: #{dhg_hgnnp_forward.1} parent=5 // pred_region
        // Predicated region
        $region29: #{dhg_hgnnp_forward.1} parent=27 // pred_check
          %p176 = pneg %p95
        $region30: #{dhg_hgnnp_forward.1} parent=27 // pred_check_branch
          %178 = sbr.rel (%p176) target = $region32
        $region31: #{dhg_hgnnp_forward.1} parent=27 // pred_region
          %p179 = scmp.lt.s32.totalorder %s12, 1
          %s180 = scalar_select %p179, %s12, 1
          %s181 = smul.addr %s180, 16
          %s182 = smul.addr %s181, 4
          %s183 = scalar_lea.vmem %s3, %s182
        $region32: #{dhg_hgnnp_forward.1} parent=27 // pred_fallthru
          _
        // Predicated region
        $region33: #{dhg_hgnnp_forward.1} parent=27 // pred_check
          %p184 = pneg %p121
        $region34: #{dhg_hgnnp_forward.1} parent=27 // pred_check_branch
          %186 = sbr.rel (%p184) target = $region36
        $region35: #{dhg_hgnnp_forward.1} parent=27 // pred_region
          %p187 = scmp.lt.s32.totalorder %s12, 1
          %s188 = scalar_select %p187, %s12, 1
          %s189 = scalar_lea.vmem %s4, %s188
        $region36: #{dhg_hgnnp_forward.1} parent=27 // pred_fallthru
          _
      $region28: #{dhg_hgnnp_forward.1} parent=5 // pred_fallthru
        _
      %p190 = scmp.le.s32.totalorder 1, %s12
      %p191 = scmp.lt.s32.totalorder %s12, 3
      %p192 = pnand %p190, %p191
      %p193 = pneg %p192
      // Predicated region
      $region37: #{dhg_hgnnp_forward.1} parent=5 // pred_check
        _
      $region38: #{dhg_hgnnp_forward.1} parent=5 // pred_check_branch
        %195 = sbr.rel (%p192) target = $region40
      $region39: #{dhg_hgnnp_forward.1} parent=5 // pred_region
        %s196 = ssub.s32 %s12, 1
        %p197 = pneg %p33
        %p198 = pneg %p30
        %p199 = pneg %p54
        %p200 = pneg %p51
        %p201 = pneg %p75
        %p202 = pneg %p72
        %p203 = scmp.lt.s32.totalorder %s17, 1
        %s204 = scalar_select %p203, %s17, 1
        %s205 = smul.addr %s204, 16
        %s206 = smul.addr %s205, 4
        %s207 = scalar_lea.vmem %s3, %s206
        %p208 = pneg %p101
        %p209 = pneg %p98
        %p210 = scmp.lt.s32.totalorder %s17, 1
        %s211 = scalar_select %p210, %s17, 1
        %s212 = scalar_lea.vmem %s4, %s211
        %p213 = pneg %p127
        %p214 = pneg %p124
        %p215 = pneg %p148
        %p216 = pneg %p145
        %p217 = scmp.lt.s32.totalorder %s17, 1
        %s218 = scalar_select %p217, %s17, 1
        %s219 = smul.addr %s218, 16
        %s220 = smul.addr %s219, 4
        %s221 = scalar_lea.vmem %s3, %s220
        %p222 = scmp.lt.s32.totalorder %s17, 1
        %s223 = scalar_select %p222, %s17, 1
        %s224 = scalar_lea.vmem %s4, %s223
        %p226 = scmp.eq.s32.totalorder %s17, 0
        // Predicated region
        $region41: #{dhg_hgnnp_forward.1} parent=39 // pred_check
          %p227 = pneg %p226
        $region42: #{dhg_hgnnp_forward.1} parent=39 // pred_check_branch
          %229 = sbr.rel (%p227) target = $region44
        $region43: #{dhg_hgnnp_forward.1} parent=39 // pred_region
          %v230 = vld [vmem:[%s2] sm:$0xff]
          %231 = vst [vmem:[#allocation2] sm:$0xff] %v230
        $region44: #{dhg_hgnnp_forward.1} parent=39 // pred_fallthru
          _
        %v232 = vld [vmem:[#allocation2] sm:$0xff]
        %v233 = vld [vmem:[%s221] sm:$0xf]
        %v234 = vld [vmem:[%s221 + $0x4] sm:$0xf]
        %v235 = vld [vmem:[%s221 + $0x8] sm:$0xf]
        %v236 = vld [vmem:[%s221 + $0xc] sm:$0xf]
        %v237 = vld [vmem:[%s221 + $0x10] sm:$0xf]
        %v238 = vld [vmem:[%s221 + $0x14] sm:$0xf]
        %v239 = vld [vmem:[%s221 + $0x18] sm:$0xf]
        %v240 = vld [vmem:[%s221 + $0x1c] sm:$0xf]
        %v241 = vld [vmem:[%s221 + $0x20] sm:$0xf]
        %v242 = vld [vmem:[%s221 + $0x24] sm:$0xf]
        %v243 = vld [vmem:[%s221 + $0x28] sm:$0xf]
        %v244 = vld [vmem:[%s221 + $0x2c] sm:$0xf]
        %v245 = vld [vmem:[%s221 + $0x30] sm:$0xf]
        %v246 = vld [vmem:[%s221 + $0x34] sm:$0xf]
        %v247 = vld [vmem:[%s221 + $0x38] sm:$0xf]
        %v248 = vld [vmem:[%s221 + $0x3c] sm:$0xf]
        %v249 = vld [vmem:[%s224] sm:$0x1]
        %v250 = vpack.c.bf16 %v232, %v232
        %v252 = vperm.slane %v249, 0
        %v270 = vunpack.c.l.b16 %v233
        %v271 = vunpack.c.l.b16 %v234
        %v272 = vunpack.c.l.b16 %v235
        %v273 = vunpack.c.l.b16 %v236
        %v274 = vunpack.c.l.b16 %v237
        %v275 = vunpack.c.l.b16 %v238
        %v276 = vunpack.c.l.b16 %v239
        %v277 = vunpack.c.l.b16 %v240
        %v278 = vunpack.c.l.b16 %v241
        %v279 = vunpack.c.l.b16 %v242
        %v280 = vunpack.c.l.b16 %v243
        %v281 = vunpack.c.l.b16 %v244
        %v282 = vunpack.c.l.b16 %v245
        %v283 = vunpack.c.l.b16 %v246
        %v284 = vunpack.c.l.b16 %v247
        %v285 = vunpack.c.l.b16 %v248
        %v286 = vpack.c.b16 %v271, %v270
        %v287 = vpack.c.b16 %v273, %v272
        %v288 = vpack.c.b16 %v275, %v274
        %v289 = vpack.c.b16 %v277, %v276
        %v290 = vpack.c.b16 %v279, %v278
        %v291 = vpack.c.b16 %v281, %v280
        %v292 = vpack.c.b16 %v283, %v282
        %v293 = vpack.c.b16 %v285, %v284
        %302 = vmatpush.bf16.msra.mxu0 %v293
        %303 = vmatpush.bf16.msra.mxu0 %v292
        %304 = vmatpush.bf16.msra.mxu0 %v291
        %305 = vmatpush.bf16.msra.mxu0 %v290
        %306 = vmatpush.bf16.msra.mxu0 %v289
        %307 = vmatpush.bf16.msra.mxu0 %v288
        %308 = vmatpush.bf16.msra.mxu0 %v287
        %309 = vmatpush.bf16.msra.mxu0 %v286
        %310 = vmatmul.bf16.gmra.mxu0 %v250
        %v311 = vpop.f32.mrf.mxu0
        %v312 = vadd.f32 %v252, %v311
        %v313 = vpop.f32.mrf.mxu0
        %314 = vdwg.mxu0
        %v315 = vld [vmem:[%s1] sm:$0xf]
        %v316 = vld [vmem:[%s1 + $0x4] sm:$0xf]
        %v317 = vld [vmem:[%s1 + $0x8] sm:$0xf]
        %v318 = vld [vmem:[%s1 + $0xc] sm:$0xf]
        %v319 = vld [vmem:[%s1 + $0x10] sm:$0xf]
        %v320 = vld [vmem:[%s1 + $0x14] sm:$0xf]
        %v321 = vld [vmem:[%s1 + $0x18] sm:$0xf]
        %v322 = vld [vmem:[%s1 + $0x1c] sm:$0xf]
        %v323 = vld [vmem:[%s1 + $0x20] sm:$0xf]
        %v324 = vld [vmem:[%s1 + $0x24] sm:$0xf]
        %v325 = vld [vmem:[%s1 + $0x28] sm:$0xf]
        %v326 = vld [vmem:[%s1 + $0x2c] sm:$0xf]
        %v327 = vld [vmem:[%s1 + $0x30] sm:$0xf]
        %v328 = vld [vmem:[%s1 + $0x34] sm:$0xf]
        %v329 = vld [vmem:[%s1 + $0x38] sm:$0xf]
        %v330 = vld [vmem:[%s1 + $0x3c] sm:$0xf]
        %v331 = vpack.c.bf16 %v312, %v312
        %v348 = vunpack.c.l.b16 %v315
        %v349 = vunpack.c.l.b16 %v316
        %v350 = vunpack.c.l.b16 %v317
        %v351 = vunpack.c.l.b16 %v318
        %v352 = vunpack.c.l.b16 %v319
        %v353 = vunpack.c.l.b16 %v320
        %v354 = vunpack.c.l.b16 %v321
        %v355 = vunpack.c.l.b16 %v322
        %v356 = vunpack.c.l.b16 %v323
        %v357 = vunpack.c.l.b16 %v324
        %v358 = vunpack.c.l.b16 %v325
        %v359 = vunpack.c.l.b16 %v326
        %v360 = vunpack.c.l.b16 %v327
        %v361 = vunpack.c.l.b16 %v328
        %v362 = vunpack.c.l.b16 %v329
        %v363 = vunpack.c.l.b16 %v330
        %v364 = vpack.c.b16 %v349, %v348
        %v365 = vpack.c.b16 %v351, %v350
        %v366 = vpack.c.b16 %v353, %v352
        %v367 = vpack.c.b16 %v355, %v354
        %v368 = vpack.c.b16 %v357, %v356
        %v369 = vpack.c.b16 %v359, %v358
        %v370 = vpack.c.b16 %v361, %v360
        %v371 = vpack.c.b16 %v363, %v362
        %vm372 = vcmask 64512
        %v374 = vsel %vm372, %v364, 0
        %v377 = vsel %vm372, %v365, 0
        %v380 = vsel %vm372, %v366, 0
        %v383 = vsel %vm372, %v367, 0
        %v386 = vsel %vm372, %v368, 0
        %v389 = vsel %vm372, %v369, 0
        %v392 = vsel %vm372, %v370, 0
        %v395 = vsel %vm372, %v371, 0
        %vm397 = vcmask 1043456
        %v399 = vsel %vm397, %v331, 0
        %401 = vmatpush.bf16.msra.mxu0 0
        %402 = vmatpush.bf16.msra.mxu0 0
        %403 = vmatpush.bf16.msra.mxu0 0
        %404 = vmatpush.bf16.msra.mxu0 0
        %405 = vmatpush.bf16.msra.mxu0 0
        %406 = vmatpush.bf16.msra.mxu0 0
        %407 = vmatpush.bf16.msra.mxu0 0
        %408 = vmatpush.bf16.msra.mxu0 %v399
        %409 = vmatmul.bf16.gmra.mxu0 %v374
        %v410 = vpop.f32.mrf.mxu0
        %v411 = vadd.f32 0.0, %v410
        %v412 = vpop.f32.mrf.mxu0
        %v413 = vadd.f32 0.0, %v412
        %414 = vmatmul.bf16.gmra.mxu0 %v377
        %v415 = vpop.f32.mrf.mxu0
        %v416 = vadd.f32 0.0, %v415
        %v417 = vpop.f32.mrf.mxu0
        %v418 = vadd.f32 0.0, %v417
        %419 = vmatmul.bf16.gmra.mxu0 %v380
        %v420 = vpop.f32.mrf.mxu0
        %v421 = vadd.f32 0.0, %v420
        %v422 = vpop.f32.mrf.mxu0
        %v423 = vadd.f32 0.0, %v422
        %424 = vmatmul.bf16.gmra.mxu0 %v383
        %v425 = vpop.f32.mrf.mxu0
        %v426 = vadd.f32 0.0, %v425
        %v427 = vpop.f32.mrf.mxu0
        %v428 = vadd.f32 0.0, %v427
        %429 = vmatmul.bf16.gmra.mxu0 %v386
        %v430 = vpop.f32.mrf.mxu0
        %v431 = vadd.f32 0.0, %v430
        %v432 = vpop.f32.mrf.mxu0
        %v433 = vadd.f32 0.0, %v432
        %434 = vmatmul.bf16.gmra.mxu0 %v389
        %v435 = vpop.f32.mrf.mxu0
        %v436 = vadd.f32 0.0, %v435
        %v437 = vpop.f32.mrf.mxu0
        %v438 = vadd.f32 0.0, %v437
        %439 = vmatmul.bf16.gmra.mxu0 %v392
        %v440 = vpop.f32.mrf.mxu0
        %v441 = vadd.f32 0.0, %v440
        %v442 = vpop.f32.mrf.mxu0
        %v443 = vadd.f32 0.0, %v442
        %444 = vmatmul.bf16.gmra.mxu0 %v395
        %v445 = vpop.f32.mrf.mxu0
        %v446 = vadd.f32 0.0, %v445
        %v447 = vpop.f32.mrf.mxu0
        %v448 = vadd.f32 0.0, %v447
        %449 = vdwg.mxu0
        %v450 = vld [vmem:[%s0] sm:$0xf]
        %v451 = vpack.c.bf16 %v413, %v411
        %v452 = vpack.c.bf16 %v418, %v416
        %v453 = vpack.c.bf16 %v423, %v421
        %v454 = vpack.c.bf16 %v428, %v426
        %v455 = vpack.c.bf16 %v433, %v431
        %v456 = vpack.c.bf16 %v438, %v436
        %v457 = vpack.c.bf16 %v443, %v441
        %v458 = vpack.c.bf16 %v448, %v446
        %459 = vmatpush.bf16.msra.mxu0 %v458
        %460 = vmatpush.bf16.msra.mxu0 %v457
        %461 = vmatpush.bf16.msra.mxu0 %v456
        %462 = vmatpush.bf16.msra.mxu0 %v455
        %463 = vmatpush.bf16.msra.mxu0 %v454
        %464 = vmatpush.bf16.msra.mxu0 %v453
        %465 = vmatpush.bf16.msra.mxu0 %v452
        %466 = vmatpush.bf16.msra.mxu0 %v451
        %467 = vmatmul.bf16.gmra.mxu0 %v450
        %v468 = vpop.f32.mrf.mxu0
        %v469 = vadd.f32 0.0, %v468
        %v470 = vpop.f32.mrf.mxu0
        %471 = vdwg.mxu0
        %v472 = vmax.f32 %v469, 0.0
        %473 = vst [vmem:[#allocation2] sm:$0xff] %v472
        // Predicated region
        $region45: #{dhg_hgnnp_forward.1} parent=39 // pred_check
          %p474 = pneg %p145
        $region46: #{dhg_hgnnp_forward.1} parent=39 // pred_check_branch
          %476 = sbr.rel (%p474) target = $region48
        $region47: #{dhg_hgnnp_forward.1} parent=39 // pred_region
          %478 = vsyncadd [#allocation3], 0
          %s480 = sshll.u32 [#allocation2], 4
          %s481 = int_to_ptr.vmem [resolvable:$true] %s480
          %s482 = sshll.u32 %s5, 4
          %s483 = int_to_ptr.hbm [resolvable:$true] %s482
          %485 = dma.vmem_to_hbm [thread:$0]  %s481, 128, %s483, [#allocation3]
        $region48: #{dhg_hgnnp_forward.1} parent=39 // pred_fallthru
          _
        // Predicated region
        $region49: #{dhg_hgnnp_forward.1} parent=39 // pred_check
          %p486 = pneg %p145
        $region50: #{dhg_hgnnp_forward.1} parent=39 // pred_check_branch
          %488 = sbr.rel (%p486) target = $region52
        $region51: #{dhg_hgnnp_forward.1} parent=39 // pred_region
          %490 = dma.done [#allocation3], 128
        $region52: #{dhg_hgnnp_forward.1} parent=39 // pred_fallthru
          _
      $region40: #{dhg_hgnnp_forward.1} parent=5 // pred_fallthru
        _
      %p491 = scmp.le.s32.totalorder 2, %s12
      // Predicated region
      $region53: #{dhg_hgnnp_forward.1} parent=5 // pred_check
        %p492 = pneg %p491
      $region54: #{dhg_hgnnp_forward.1} parent=5 // pred_check_branch
        %494 = sbr.rel (%p492) target = $region56
      $region55: #{dhg_hgnnp_forward.1} parent=5 // pred_region
        %s495 = ssub.s32 %s12, 2
      $region56: #{dhg_hgnnp_forward.1} parent=5 // pred_fallthru
        _
    $region6: #{dhg_hgnnp_forward.1} parent=1 // loop_footer
      %s16 = sadd.s32 1, %s12
    $region7: #{dhg_hgnnp_forward.1} parent=1 // loop_footer_branch
      %11 = sbr.rel target = $region3
    $region8: #{dhg_hgnnp_forward.1} parent=1 // loop_exit
      _
    %496 = vsyncpa [#allocation3], 1
    %s497 = scalar_lea.sflag [#allocation3], 1
    %498 = vsyncpa %s497, 1

</llo_original>
